<compile_context>
chip_gen: v7x
topology: tpu7x:2x2x1
jax: 0.10.0
libtpu: 0.0.40
codegen_flags: <defaults>
</compile_context>

<pallas_src>
import functools
import math

import jax
import jax.numpy as jnp
from jax.experimental import pallas as pl
from jax.experimental.pallas import tpu as pltpu


def _pick_tile(total, preferred, align):
    """Largest multiple-of-`align` divisor of `total` that is <= preferred,
    falling back to the full dimension (always a legal BlockSpec size)."""
    if total <= preferred:
        return total
    t = (preferred // align) * align
    while t >= align:
        if total % t == 0:
            return t
        t -= align
    return total


# ---------------- Kernel 1: q / k / v projections ----------------
def _proj_kernel(x1_ref, x2_ref, wq_ref, wk_ref, wv_ref,
                 q_ref, k_ref, v_ref, accq_ref, acck_ref, accv_ref):
    """Grid = (m, n, kk); kk (contraction) innermost.  Accumulate in f32 scratch,
    write bf16 outputs once on the last K step (no zero-init + load-add pass)."""
    kk = pl.program_id(2)

    x1 = x1_ref[...]
    x2 = x2_ref[...]
    pq = jnp.dot(x1, wq_ref[...], preferred_element_type=jnp.float32)
    pk = jnp.dot(x2, wk_ref[...], preferred_element_type=jnp.float32)
    pv = jnp.dot(x2, wv_ref[...], preferred_element_type=jnp.float32)

    @pl.when(kk == 0)
    def _():
        accq_ref[...] = pq
        acck_ref[...] = pk
        accv_ref[...] = pv

    @pl.when(kk > 0)
    def _():
        accq_ref[...] += pq
        acck_ref[...] += pk
        accv_ref[...] += pv

    @pl.when(kk == pl.num_programs(2) - 1)
    def _():
        q_ref[...] = accq_ref[...].astype(q_ref.dtype)
        k_ref[...] = acck_ref[...].astype(k_ref.dtype)
        v_ref[...] = accv_ref[...].astype(v_ref.dtype)


# ---------------- Kernel 2: attention matmuls ----------------
def _attn_kernel(q_ref, k_ref, v_ref, o_ref, *, scale, score_order):
    """One (batch, query-tile) per grid step.  scale = (1/sqrt(dim_per_head))^3 *
    softmax_scale folded into a single multiply.  bf16 MXU inputs, f32 accumulation."""
    q = q_ref[...]          # (tq, D) bf16
    k = k_ref[...]          # (S,  D) bf16
    v = v_ref[...]          # (S,  D) bf16

    if score_order:
        # (q @ k^T) * scale, then @ v  -- contraction on last dims, no transpose copy.
        s = jax.lax.dot_general(q, k, (((1,), (1,)), ((), ())),
                                preferred_element_type=jnp.float32) * scale
        out = jnp.dot(s.astype(jnp.bfloat16), v,
                      preferred_element_type=jnp.float32)
    else:
        # q @ (k^T @ v) * scale -- cheaper when S > D, avoids the (S, S) score tile.
        kv = jax.lax.dot_general(k, v, (((0,), (0,)), ((), ())),
                                 preferred_element_type=jnp.float32) * scale
        out = jnp.dot(q, kv.astype(jnp.bfloat16),
                      preferred_element_type=jnp.float32)

    # TODO(synk): nn.Dropout skipped (inference-mode identity; no RNG dropout applied).
    o_ref[...] = out.astype(o_ref.dtype)


def model_forward(x1, x2, wq, wk, wv, *, num_heads, compute_dtype=jnp.bfloat16):
    B, S, D = x1.shape
    dim_per_head = D // num_heads
    inv_sqrt_dph = 1.0 / math.sqrt(dim_per_head)
    softmax_scale = math.sqrt(math.sqrt(D))
    # q, k, v each carry one 1/sqrt(dim_per_head); softmax_scale multiplies the scores.
    # Fold everything into one scalar applied once between the two attention matmuls.
    total_scale = (inv_sqrt_dph ** 3) * softmax_scale

    M = B * S
    x1f = x1.reshape(M, D).astype(compute_dtype)
    x2f = x2.reshape(M, D).astype(compute_dtype)
    wq_c = wq.astype(compute_dtype)
    wk_c = wk.astype(compute_dtype)
    wv_c = wv.astype(compute_dtype)

    # Physical VMEM budget (per core); fall back to v7x's 64 MiB if unavailable.
    try:
        vmem_cap = int(pltpu.get_tpu_info().vmem_capacity_bytes)
    except Exception:
        vmem_cap = 64 * 1024 * 1024
    big_vmem = vmem_cap >= 100 * 1024 * 1024          # v5e / v6e (128 MiB)

    # ---- Kernel 1 tiling: tile M (was full-M resident), wider N tiles on big-VMEM chips ----
    tm = _pick_tile(M, 512, 8)
    tn = _pick_tile(D, 1024 if big_vmem else 512, 128)   # wider N -> fewer x re-reads
    tk = _pick_tile(D, 512, 128)

    k1_bytes = (2 * 2 * tm * tk * 2       # x1, x2 bf16 tiles, double-buffered
                + 3 * 2 * tk * tn * 2     # Wq/Wk/Wv bf16 tiles, double-buffered
                + 3 * tm * tn * 4         # f32 accumulators (scratch)
                + 3 * 2 * tm * tn * 2)    # bf16 output tiles, double-buffered
    k1_limit = int(min(max(2 * k1_bytes, 32 * 1024 * 1024),
                       vmem_cap - 8 * 1024 * 1024))

    q, k, v = pl.pallas_call(
        _proj_kernel,
        out_shape=[jax.ShapeDtypeStruct((M, D), compute_dtype)] * 3,
        grid_spec=pltpu.PrefetchScalarGridSpec(
            num_scalar_prefetch=0,
            grid=(M // tm, D // tn, D // tk),            # (M tiles, N tiles, K reduction)
            in_specs=[
                pl.BlockSpec((tm, tk), lambda m, n, kk: (m, kk)),   # x1
                pl.BlockSpec((tm, tk), lambda m, n, kk: (m, kk)),   # x2
                pl.BlockSpec((tk, tn), lambda m, n, kk: (kk, n)),   # Wq
                pl.BlockSpec((tk, tn), lambda m, n, kk: (kk, n)),   # Wk
                pl.BlockSpec((tk, tn), lambda m, n, kk: (kk, n)),   # Wv
            ],
            out_specs=[pl.BlockSpec((tm, tn), lambda m, n, kk: (m, n))] * 3,
            scratch_shapes=[pltpu.VMEM((tm, tn), jnp.float32)] * 3,
        ),
        compiler_params=pltpu.CompilerParams(
            dimension_semantics=("parallel", "parallel", "arbitrary"),
            vmem_limit_bytes=k1_limit),
    )(x1f, x2f, wq_c, wk_c, wv_c)

    qb = q.reshape(B, S, D)
    kb = k.reshape(B, S, D)
    vb = v.reshape(B, S, D)

    # ---- Kernel 2: per-(batch, query-tile) attention ----
    score_order = S <= D
    tq = _pick_tile(S, 256, 8) if score_order else S

    k2_bytes = (2 * tq * D * 2            # q tile (bf16, double-buffered)
                + 2 * 2 * S * D * 2       # k, v (bf16, double-buffered)
                + 2 * tq * D * 4          # output tile (f32, double-buffered)
                + tq * max(S, 128) * 4)   # score intermediate
    k2_limit = int(min(max(2 * k2_bytes, 32 * 1024 * 1024),
                       vmem_cap - 8 * 1024 * 1024))

    attn_kernel = functools.partial(_attn_kernel, scale=total_scale,
                                    score_order=score_order)
    out = pl.pallas_call(
        attn_kernel,
        out_shape=jax.ShapeDtypeStruct((B, S, D), x1.dtype),
        grid_spec=pltpu.PrefetchScalarGridSpec(
            num_scalar_prefetch=0,
            grid=(B, S // tq),
            in_specs=[
                pl.BlockSpec((pl.Squeezed(), tq, D), lambda b, s: (b, s, 0)),  # q
                pl.BlockSpec((pl.Squeezed(), S, D), lambda b, s: (b, 0, 0)),   # k
                pl.BlockSpec((pl.Squeezed(), S, D), lambda b, s: (b, 0, 0)),   # v
            ],
            out_specs=pl.BlockSpec((pl.Squeezed(), tq, D), lambda b, s: (b, s, 0)),
        ),
        compiler_params=pltpu.CompilerParams(
            dimension_semantics=("parallel", "parallel"),
            vmem_limit_bytes=k2_limit),
    )(qb, kb, vb)
    return out


def reference_forward(x1, x2, wq, wk, wv, *, num_heads, compute_dtype=jnp.bfloat16):
    """Pure-JAX reference mirroring the kernel's bf16-input / f32-accumulate numerics
    (including the bf16 q/k/v intermediates and the bf16 score before the second dot)."""
    S, D = x1.shape[-2], x1.shape[-1]
    inv_sqrt_dph = 1.0 / math.sqrt(D // num_heads)
    softmax_scale = math.sqrt(math.sqrt(D))
    total_scale = (inv_sqrt_dph ** 3) * softmax_scale

    f32 = jnp.float32
    x1c = x1.astype(compute_dtype).astype(f32)
    x2c = x2.astype(compute_dtype).astype(f32)
    wqc = wq.astype(compute_dtype).astype(f32)
    wkc = wk.astype(compute_dtype).astype(f32)
    wvc = wv.astype(compute_dtype).astype(f32)

    q = (x1c @ wqc).astype(compute_dtype).astype(f32)
    k = (x2c @ wkc).astype(compute_dtype).astype(f32)
    v = (x2c @ wvc).astype(compute_dtype).astype(f32)

    if S <= D:
        s = (q @ jnp.swapaxes(k, -2, -1)) * total_scale
        out = s.astype(compute_dtype).astype(f32) @ v
    else:
        kv = (jnp.swapaxes(k, -2, -1) @ v) * total_scale
        out = q @ kv.astype(compute_dtype).astype(f32)
    return out.astype(x1.dtype)


if __name__ == "__main__":
    # Small shapes consistent with the module: (B, S, D) with D divisible by num_heads.
    B, S, D = 2, 8, 128
    num_heads = 4

    key = jax.random.PRNGKey(0)
    k1, k2, k3, k4, k5 = jax.random.split(key, 5)
    x1 = jax.random.normal(k1, (B, S, D), dtype=jnp.float32)
    x2 = jax.random.normal(k2, (B, S, D), dtype=jnp.float32)
    # torch.Tensor(dim, dim) is uninitialized; use a deterministic scaled-normal init.
    wq = jax.random.normal(k3, (D, D), dtype=jnp.float32) * 0.02
    wk = jax.random.normal(k4, (D, D), dtype=jnp.float32) * 0.02
    wv = jax.random.normal(k5, (D, D), dtype=jnp.float32) * 0.02

    out = model_forward(x1, x2, wq, wk, wv, num_heads=num_heads)
    out = jax.block_until_ready(out)

    ref = reference_forward(x1, x2, wq, wk, wv, num_heads=num_heads)
    assert out.shape == (B, S, D)
    assert jnp.allclose(out, ref, atol=2e-3, rtol=2e-2), "mismatch vs reference"

    print("KERNEL_OK")
</pallas_src>

<mosaic_0001>
module attributes {stable_mosaic.version = 11 : i64} {
  func.func @_proj_kernel(%arg0: i32, %arg1: i32, %arg2: i32, %arg3: memref<16x128xbf16, #tpu.memory_space<vmem>>, %arg4: memref<16x128xbf16, #tpu.memory_space<vmem>>, %arg5: memref<128x128xbf16, #tpu.memory_space<vmem>>, %arg6: memref<128x128xbf16, #tpu.memory_space<vmem>>, %arg7: memref<128x128xbf16, #tpu.memory_space<vmem>>, %arg8: memref<16x128xbf16, #tpu.memory_space<vmem>>, %arg9: memref<16x128xbf16, #tpu.memory_space<vmem>>, %arg10: memref<16x128xbf16, #tpu.memory_space<vmem>>, %arg11: memref<16x128xf32, #tpu.memory_space<vmem>>, %arg12: memref<16x128xf32, #tpu.memory_space<vmem>>, %arg13: memref<16x128xf32, #tpu.memory_space<vmem>>) attributes {dimension_semantics = [#tpu.dimension_semantics<parallel>, #tpu.dimension_semantics<parallel>, #tpu.dimension_semantics<arbitrary>], iteration_bounds = array<i64: 1, 1, 1>, scalar_prefetch = 0 : i64, scratch_operands = 3 : i64, tpu.core_type = #tpu.core_type<tc>, window_params = [{transform_indices = @transform_0, window_bounds = array<i64: 16, 128>}, {transform_indices = @transform_1, window_bounds = array<i64: 16, 128>}, {transform_indices = @transform_2, window_bounds = array<i64: 128, 128>}, {transform_indices = @transform_3, window_bounds = array<i64: 128, 128>}, {transform_indices = @transform_4, window_bounds = array<i64: 128, 128>}, {transform_indices = @transform_5, window_bounds = array<i64: 16, 128>}, {transform_indices = @transform_6, window_bounds = array<i64: 16, 128>}, {transform_indices = @transform_7, window_bounds = array<i64: 16, 128>}]} {
    %c0 = arith.constant 0 : index
    %c0_0 = arith.constant 0 : index
    %0 = vector.load %arg3[%c0, %c0_0] : memref<16x128xbf16, #tpu.memory_space<vmem>>, vector<16x128xbf16>
    %c0_1 = arith.constant 0 : index
    %c0_2 = arith.constant 0 : index
    %1 = vector.load %arg4[%c0_1, %c0_2] : memref<16x128xbf16, #tpu.memory_space<vmem>>, vector<16x128xbf16>
    %c0_3 = arith.constant 0 : index
    %c0_4 = arith.constant 0 : index
    %2 = vector.load %arg5[%c0_3, %c0_4] : memref<128x128xbf16, #tpu.memory_space<vmem>>, vector<128x128xbf16>
    %cst = arith.constant dense<0.000000e+00> : vector<16x128xf32>
    %3 = tpu.matmul %0, %2, %cst {dimension_numbers = #tpu.dot_dimension_numbers<[1], [0], [0], [1], [0, 0, 1, 1], [], []>} : vector<16x128xbf16>, vector<128x128xbf16>, vector<16x128xf32> -> vector<16x128xf32>
    %c0_5 = arith.constant 0 : index
    %c0_6 = arith.constant 0 : index
    %4 = vector.load %arg6[%c0_5, %c0_6] : memref<128x128xbf16, #tpu.memory_space<vmem>>, vector<128x128xbf16>
    %cst_7 = arith.constant dense<0.000000e+00> : vector<16x128xf32>
    %5 = tpu.matmul %1, %4, %cst_7 {dimension_numbers = #tpu.dot_dimension_numbers<[1], [0], [0], [1], [0, 0, 1, 1], [], []>} : vector<16x128xbf16>, vector<128x128xbf16>, vector<16x128xf32> -> vector<16x128xf32>
    %c0_8 = arith.constant 0 : index
    %c0_9 = arith.constant 0 : index
    %6 = vector.load %arg7[%c0_8, %c0_9] : memref<128x128xbf16, #tpu.memory_space<vmem>>, vector<128x128xbf16>
    %cst_10 = arith.constant dense<0.000000e+00> : vector<16x128xf32>
    %7 = tpu.matmul %1, %6, %cst_10 {dimension_numbers = #tpu.dot_dimension_numbers<[1], [0], [0], [1], [0, 0, 1, 1], [], []>} : vector<16x128xbf16>, vector<128x128xbf16>, vector<16x128xf32> -> vector<16x128xf32>
    %c0_i32 = arith.constant 0 : i32
    %8 = arith.cmpi eq, %arg2, %c0_i32 : i32
    %9 = arith.extui %8 : i1 to i32
    %c0_i32_11 = arith.constant 0 : i32
    %10 = arith.cmpi ne, %9, %c0_i32_11 : i32
    scf.if %10 {
      %c0_16 = arith.constant 0 : index
      %c0_17 = arith.constant 0 : index
      %17 = vector.load %arg11[%c0_16, %c0_17] : memref<16x128xf32, #tpu.memory_space<vmem>>, vector<16x128xf32>
      tpu.vector_store %arg11[%c0_16, %c0_17], %3 {strides = array<i32>} : memref<16x128xf32, #tpu.memory_space<vmem>>, vector<16x128xf32>,
      %c0_18 = arith.constant 0 : index
      %c0_19 = arith.constant 0 : index
      %18 = vector.load %arg12[%c0_18, %c0_19] : memref<16x128xf32, #tpu.memory_space<vmem>>, vector<16x128xf32>
      tpu.vector_store %arg12[%c0_18, %c0_19], %5 {strides = array<i32>} : memref<16x128xf32, #tpu.memory_space<vmem>>, vector<16x128xf32>,
      %c0_20 = arith.constant 0 : index
      %c0_21 = arith.constant 0 : index
      %19 = vector.load %arg13[%c0_20, %c0_21] : memref<16x128xf32, #tpu.memory_space<vmem>>, vector<16x128xf32>
      tpu.vector_store %arg13[%c0_20, %c0_21], %7 {strides = array<i32>} : memref<16x128xf32, #tpu.memory_space<vmem>>, vector<16x128xf32>,
    } else {
    }
    %c0_i32_12 = arith.constant 0 : i32
    %11 = arith.cmpi sgt, %arg2, %c0_i32_12 : i32
    %12 = arith.extui %11 : i1 to i32
    %c0_i32_13 = arith.constant 0 : i32
    %13 = arith.cmpi ne, %12, %c0_i32_13 : i32
    scf.if %13 {
      %c0_16 = arith.constant 0 : index
      %c0_17 = arith.constant 0 : index
      %17 = vector.load %arg11[%c0_16, %c0_17] : memref<16x128xf32, #tpu.memory_space<vmem>>, vector<16x128xf32>
      %18 = arith.addf %17, %3 : vector<16x128xf32>
      %c0_18 = arith.constant 0 : index
      %c0_19 = arith.constant 0 : index
      %19 = vector.load %arg11[%c0_18, %c0_19] : memref<16x128xf32, #tpu.memory_space<vmem>>, vector<16x128xf32>
      tpu.vector_store %arg11[%c0_18, %c0_19], %18 {strides = array<i32>} : memref<16x128xf32, #tpu.memory_space<vmem>>, vector<16x128xf32>,
      %c0_20 = arith.constant 0 : index
      %c0_21 = arith.constant 0 : index
      %20 = vector.load %arg12[%c0_20, %c0_21] : memref<16x128xf32, #tpu.memory_space<vmem>>, vector<16x128xf32>
      %21 = arith.addf %20, %5 : vector<16x128xf32>
      %c0_22 = arith.constant 0 : index
      %c0_23 = arith.constant 0 : index
      %22 = vector.load %arg12[%c0_22, %c0_23] : memref<16x128xf32, #tpu.memory_space<vmem>>, vector<16x128xf32>
      tpu.vector_store %arg12[%c0_22, %c0_23], %21 {strides = array<i32>} : memref<16x128xf32, #tpu.memory_space<vmem>>, vector<16x128xf32>,
      %c0_24 = arith.constant 0 : index
      %c0_25 = arith.constant 0 : index
      %23 = vector.load %arg13[%c0_24, %c0_25] : memref<16x128xf32, #tpu.memory_space<vmem>>, vector<16x128xf32>
      %24 = arith.addf %23, %7 : vector<16x128xf32>
      %c0_26 = arith.constant 0 : index
      %c0_27 = arith.constant 0 : index
      %25 = vector.load %arg13[%c0_26, %c0_27] : memref<16x128xf32, #tpu.memory_space<vmem>>, vector<16x128xf32>
      tpu.vector_store %arg13[%c0_26, %c0_27], %24 {strides = array<i32>} : memref<16x128xf32, #tpu.memory_space<vmem>>, vector<16x128xf32>,
    } else {
    }
    %c0_i32_14 = arith.constant 0 : i32
    %14 = arith.cmpi eq, %arg2, %c0_i32_14 : i32
    %15 = arith.extui %14 : i1 to i32
    %c0_i32_15 = arith.constant 0 : i32
    %16 = arith.cmpi ne, %15, %c0_i32_15 : i32
    scf.if %16 {
      %c0_16 = arith.constant 0 : index
      %c0_17 = arith.constant 0 : index
      %17 = vector.load %arg11[%c0_16, %c0_17] : memref<16x128xf32, #tpu.memory_space<vmem>>, vector<16x128xf32>
      %18 = arith.truncf %17 : vector<16x128xf32> to vector<16x128xbf16>
      %c0_18 = arith.constant 0 : index
      %c0_19 = arith.constant 0 : index
      %19 = vector.load %arg8[%c0_18, %c0_19] : memref<16x128xbf16, #tpu.memory_space<vmem>>, vector<16x128xbf16>
      tpu.vector_store %arg8[%c0_18, %c0_19], %18 {strides = array<i32>} : memref<16x128xbf16, #tpu.memory_space<vmem>>, vector<16x128xbf16>,
      %c0_20 = arith.constant 0 : index
      %c0_21 = arith.constant 0 : index
      %20 = vector.load %arg12[%c0_20, %c0_21] : memref<16x128xf32, #tpu.memory_space<vmem>>, vector<16x128xf32>
      %21 = arith.truncf %20 : vector<16x128xf32> to vector<16x128xbf16>
      %c0_22 = arith.constant 0 : index
      %c0_23 = arith.constant 0 : index
      %22 = vector.load %arg9[%c0_22, %c0_23] : memref<16x128xbf16, #tpu.memory_space<vmem>>, vector<16x128xbf16>
      tpu.vector_store %arg9[%c0_22, %c0_23], %21 {strides = array<i32>} : memref<16x128xbf16, #tpu.memory_space<vmem>>, vector<16x128xbf16>,
      %c0_24 = arith.constant 0 : index
      %c0_25 = arith.constant 0 : index
      %23 = vector.load %arg13[%c0_24, %c0_25] : memref<16x128xf32, #tpu.memory_space<vmem>>, vector<16x128xf32>
      %24 = arith.truncf %23 : vector<16x128xf32> to vector<16x128xbf16>
      %c0_26 = arith.constant 0 : index
      %c0_27 = arith.constant 0 : index
      %25 = vector.load %arg10[%c0_26, %c0_27] : memref<16x128xbf16, #tpu.memory_space<vmem>>, vector<16x128xbf16>
      tpu.vector_store %arg10[%c0_26, %c0_27], %24 {strides = array<i32>} : memref<16x128xbf16, #tpu.memory_space<vmem>>, vector<16x128xbf16>,
    } else {
    }
    return
  }
  func.func @transform_0(%arg0: i32, %arg1: i32, %arg2: i32) -> (i32, i32) {
    %c0_i32 = arith.constant 0 : i32
    return %arg0, %arg2 : i32, i32
  }
  func.func @transform_1(%arg0: i32, %arg1: i32, %arg2: i32) -> (i32, i32) {
    %c0_i32 = arith.constant 0 : i32
    return %arg0, %arg2 : i32, i32
  }
  func.func @transform_2(%arg0: i32, %arg1: i32, %arg2: i32) -> (i32, i32) {
    %c0_i32 = arith.constant 0 : i32
    return %arg2, %arg1 : i32, i32
  }
  func.func @transform_3(%arg0: i32, %arg1: i32, %arg2: i32) -> (i32, i32) {
    %c0_i32 = arith.constant 0 : i32
    return %arg2, %arg1 : i32, i32
  }
  func.func @transform_4(%arg0: i32, %arg1: i32, %arg2: i32) -> (i32, i32) {
    %c0_i32 = arith.constant 0 : i32
    return %arg2, %arg1 : i32, i32
  }
  func.func @transform_5(%arg0: i32, %arg1: i32, %arg2: i32) -> (i32, i32) {
    %c0_i32 = arith.constant 0 : i32
    return %arg0, %arg1 : i32, i32
  }
  func.func @transform_6(%arg0: i32, %arg1: i32, %arg2: i32) -> (i32, i32) {
    %c0_i32 = arith.constant 0 : i32
    return %arg0, %arg1 : i32, i32
  }
  func.func @transform_7(%arg0: i32, %arg1: i32, %arg2: i32) -> (i32, i32) {
    %c0_i32 = arith.constant 0 : i32
    return %arg0, %arg1 : i32, i32
  }
}

</mosaic_0001>

<llo_original>
// kernel: tpu_custom_call.1
$region0: #{tpu_custom_call.1}
  #allocation0 [shape = 'u32[]', space=smem, size = 0x4, offset = 0x4, fixed_abs, tag = 'smem constant byte address 0x4 - core index']
  #allocation1 [shape = 'u32[144,128]{1,0:T(1,128)}', space=vmem, size = 0x12000, scoped, tag = 'internal scratch']
  #allocation2 [shape = 'f32[16,128]{1,0:T(8,128)}', space=vmem, size = 0x2000, scoped, tag = 'scratch operand']
  #allocation3 [shape = 'f32[16,128]{1,0:T(8,128)}', space=vmem, size = 0x2000, scoped, tag = 'scratch operand']
  #allocation4 [shape = 'f32[16,128]{1,0:T(8,128)}', space=vmem, size = 0x2000, scoped, tag = 'scratch operand']
  %s0 = inlined_call_operand.hbm [shape: bf16[16,128], index: 0, kind: input, shape index: {}]
  %s1 = inlined_call_operand.hbm [shape: bf16[16,128], index: 1, kind: input, shape index: {}]
  %s2 = inlined_call_operand.hbm [shape: bf16[128,128], index: 2, kind: input, shape index: {}]
  %s3 = inlined_call_operand.hbm [shape: bf16[128,128], index: 3, kind: input, shape index: {}]
  %s4 = inlined_call_operand.hbm [shape: bf16[128,128], index: 4, kind: input, shape index: {}]
  %s5 = inlined_call_operand.hbm [shape: bf16[16,128], index: 5, kind: output, shape index: {0}]
  %s6 = inlined_call_operand.hbm [shape: bf16[16,128], index: 6, kind: output, shape index: {1}]
  %s7 = inlined_call_operand.hbm [shape: bf16[16,128], index: 7, kind: output, shape index: {2}]
  %8 = xla_tuple %s5, %s6, %s7
  %s9 = sld [smem:[#allocation0]]
  $region78: #{tpu_custom_call.1} parent=0
    _
  %s11 = ssub.s32 1, %s9
  %s12 = scalar_select 0, %s11, %s9
  $region1: #{tpu_custom_call.1} parent=0
    #allocation5 [shape = 'u8[4096]{0}', space=vmem, size = 0x1000, scoped, tag = 'input window, operand 0, single buffered']
    #allocation6 [shape = 's32[1]{0}', space=sflag, size = 0x4, scoped, tag = 'scoped memory for tpu_custom_call.1']
    #allocation7 [shape = 's32[1]{0}', space=sflag, size = 0x4, scoped, tag = 'scoped memory for tpu_custom_call.1']
    #allocation8 [shape = 'u8[4096]{0}', space=vmem, size = 0x1000, scoped, tag = 'input window, operand 1, single buffered']
    #allocation9 [shape = 's32[1]{0}', space=sflag, size = 0x4, scoped, tag = 'scoped memory for tpu_custom_call.1']
    #allocation10 [shape = 'u8[32768]{0}', space=vmem, size = 0x8000, scoped, tag = 'input window, operand 2, single buffered']
    #allocation11 [shape = 'u8[32768]{0}', space=vmem, size = 0x8000, scoped, tag = 'input window, operand 3, single buffered']
    #allocation12 [shape = 's32[1]{0}', space=sflag, size = 0x4, scoped, tag = 'scoped memory for tpu_custom_call.1']
    #allocation13 [shape = 'u8[32768]{0}', space=vmem, size = 0x8000, scoped, tag = 'input window, operand 4, single buffered']
    #allocation14 [shape = 'u8[4096]{0}', space=vmem, size = 0x1000, scoped, tag = 'output window, operand 0, single buffered']
    #allocation15 [shape = 'u8[4096]{0}', space=vmem, size = 0x1000, scoped, tag = 'output window, operand 1, single buffered']
    #allocation16 [shape = 's32[1]{0}', space=sflag, size = 0x4, scoped, tag = 'scoped memory for tpu_custom_call.1']
    #allocation17 [shape = 'u8[4096]{0}', space=vmem, size = 0x1000, scoped, tag = 'output window, operand 2, single buffered']
    %13 = vsyncpa [#allocation6], 0
    %14 = vsyncpa [#allocation9], 0
    %15 = vsyncpa [#allocation12], 0
    %16 = vsyncpa [#allocation7], 0
    %17 = vsyncpa [#allocation16], 0
    // Predicated region
    $region2: #{tpu_custom_call.1} parent=1 // pred_check
      _
    $region3: #{tpu_custom_call.1} parent=1 // pred_check_branch
      %19 = sbr.rel (0) target = $region5
    $region4: #{tpu_custom_call.1} parent=1 // pred_region
      %s21 = ssub.s32 128, 128
      %22 = vsyncadd [#allocation6], %s21
      %s23 = sshll.u32 [#allocation5], 4
      %s24 = int_to_ptr.vmem [resolvable:$true] %s23
      %29 = dma.hbm_to_vmem [thread:$0]  %s0, 128, %s24, [#allocation6], 64, 64, 4
    $region5: #{tpu_custom_call.1} parent=1 // pred_fallthru
      _
    // Predicated region
    $region6: #{tpu_custom_call.1} parent=1 // pred_check
      _
    $region7: #{tpu_custom_call.1} parent=1 // pred_check_branch
      %31 = sbr.rel (0) target = $region9
    $region8: #{tpu_custom_call.1} parent=1 // pred_region
      %s33 = ssub.s32 128, 128
      %34 = vsyncadd [#allocation9], %s33
      %s35 = sshll.u32 [#allocation8], 4
      %s36 = int_to_ptr.vmem [resolvable:$true] %s35
      %41 = dma.hbm_to_vmem [thread:$0]  %s1, 128, %s36, [#allocation9], 64, 64, 4
    $region9: #{tpu_custom_call.1} parent=1 // pred_fallthru
      _
    // Predicated region
    $region10: #{tpu_custom_call.1} parent=1 // pred_check
      _
    $region11: #{tpu_custom_call.1} parent=1 // pred_check_branch
      %43 = sbr.rel (0) target = $region13
    $region12: #{tpu_custom_call.1} parent=1 // pred_region
      %s45 = ssub.s32 1024, 1024
      %46 = vsyncadd [#allocation9], %s45
      %s47 = sshll.u32 [#allocation10], 4
      %s48 = int_to_ptr.vmem [resolvable:$true] %s47
      %53 = dma.hbm_to_vmem [thread:$0]  %s2, 1024, %s48, [#allocation9], 64, 64, 4
    $region13: #{tpu_custom_call.1} parent=1 // pred_fallthru
      _
    // Predicated region
    $region14: #{tpu_custom_call.1} parent=1 // pred_check
      _
    $region15: #{tpu_custom_call.1} parent=1 // pred_check_branch
      %55 = sbr.rel (0) target = $region17
    $region16: #{tpu_custom_call.1} parent=1 // pred_region
      %s57 = ssub.s32 1024, 1024
      %58 = vsyncadd [#allocation12], %s57
      %s59 = sshll.u32 [#allocation11], 4
      %s60 = int_to_ptr.vmem [resolvable:$true] %s59
      %65 = dma.hbm_to_vmem [thread:$0]  %s3, 1024, %s60, [#allocation12], 64, 64, 4
    $region17: #{tpu_custom_call.1} parent=1 // pred_fallthru
      _
    // Predicated region
    $region18: #{tpu_custom_call.1} parent=1 // pred_check
      _
    $region19: #{tpu_custom_call.1} parent=1 // pred_check_branch
      %67 = sbr.rel (0) target = $region21
    $region20: #{tpu_custom_call.1} parent=1 // pred_region
      %s69 = ssub.s32 1024, 1024
      %70 = vsyncadd [#allocation12], %s69
      %s71 = sshll.u32 [#allocation13], 4
      %s72 = int_to_ptr.vmem [resolvable:$true] %s71
      %77 = dma.hbm_to_vmem [thread:$0]  %s4, 1024, %s72, [#allocation12], 64, 64, 4
    $region21: #{tpu_custom_call.1} parent=1 // pred_fallthru
      _
    // Predicated region
    $region22: #{tpu_custom_call.1} parent=1 // pred_check
      _
    $region23: #{tpu_custom_call.1} parent=1 // pred_check_branch
      %79 = sbr.rel (0) target = $region25
    $region24: #{tpu_custom_call.1} parent=1 // pred_region
      %80 = dma.done [#allocation6], 128
    $region25: #{tpu_custom_call.1} parent=1 // pred_fallthru
      _
    // Predicated region
    $region26: #{tpu_custom_call.1} parent=1 // pred_check
      _
    $region27: #{tpu_custom_call.1} parent=1 // pred_check_branch
      %82 = sbr.rel (0) target = $region29
    $region28: #{tpu_custom_call.1} parent=1 // pred_region
      %83 = dma.done [#allocation9], 128
    $region29: #{tpu_custom_call.1} parent=1 // pred_fallthru
      _
    // Predicated region
    $region30: #{tpu_custom_call.1} parent=1 // pred_check
      _
    $region31: #{tpu_custom_call.1} parent=1 // pred_check_branch
      %85 = sbr.rel (0) target = $region33
    $region32: #{tpu_custom_call.1} parent=1 // pred_region
      %86 = dma.done [#allocation9], 1024
    $region33: #{tpu_custom_call.1} parent=1 // pred_fallthru
      _
    // Predicated region
    $region34: #{tpu_custom_call.1} parent=1 // pred_check
      _
    $region35: #{tpu_custom_call.1} parent=1 // pred_check_branch
      %88 = sbr.rel (0) target = $region37
    $region36: #{tpu_custom_call.1} parent=1 // pred_region
      %89 = dma.done [#allocation12], 1024
    $region37: #{tpu_custom_call.1} parent=1 // pred_fallthru
      _
    // Predicated region
    $region38: #{tpu_custom_call.1} parent=1 // pred_check
      _
    $region39: #{tpu_custom_call.1} parent=1 // pred_check_branch
      %91 = sbr.rel (0) target = $region41
    $region40: #{tpu_custom_call.1} parent=1 // pred_region
      %92 = dma.done [#allocation12], 1024
    $region41: #{tpu_custom_call.1} parent=1 // pred_fallthru
      _
    %v94 = vld [vmem:[#allocation5] sm:$0xf]
    %v95 = vld [vmem:[#allocation5 + $0x4] sm:$0xf]
    %v96 = vld [vmem:[#allocation8] sm:$0xf]
    %v97 = vld [vmem:[#allocation8 + $0x4] sm:$0xf]
    %v98 = vld [vmem:[#allocation10] sm:$0xf]
    %v99 = vld [vmem:[#allocation10 + $0x4] sm:$0xf]
    %v100 = vld [vmem:[#allocation10 + $0x8] sm:$0xf]
    %v101 = vld [vmem:[#allocation10 + $0xc] sm:$0xf]
    %v102 = vld [vmem:[#allocation10 + $0x10] sm:$0xf]
    %v103 = vld [vmem:[#allocation10 + $0x14] sm:$0xf]
    %v104 = vld [vmem:[#allocation10 + $0x18] sm:$0xf]
    %v105 = vld [vmem:[#allocation10 + $0x1c] sm:$0xf]
    %v106 = vld [vmem:[#allocation10 + $0x20] sm:$0xf]
    %v107 = vld [vmem:[#allocation10 + $0x24] sm:$0xf]
    %v108 = vld [vmem:[#allocation10 + $0x28] sm:$0xf]
    %v109 = vld [vmem:[#allocation10 + $0x2c] sm:$0xf]
    %v110 = vld [vmem:[#allocation10 + $0x30] sm:$0xf]
    %v111 = vld [vmem:[#allocation10 + $0x34] sm:$0xf]
    %v112 = vld [vmem:[#allocation10 + $0x38] sm:$0xf]
    %v113 = vld [vmem:[#allocation10 + $0x3c] sm:$0xf]
    %v116 = vunpack.c.l.b16 %v94
    %v117 = vunpack.c.l.b16 %v95
    %v118 = vpack.c.b16 %v117, %v116
    %v136 = vunpack.c.l.b16 %v98
    %v137 = vunpack.c.l.b16 %v99
    %v138 = vunpack.c.l.b16 %v100
    %v139 = vunpack.c.l.b16 %v101
    %v140 = vunpack.c.l.b16 %v102
    %v141 = vunpack.c.l.b16 %v103
    %v142 = vunpack.c.l.b16 %v104
    %v143 = vunpack.c.l.b16 %v105
    %v144 = vunpack.c.l.b16 %v106
    %v145 = vunpack.c.l.b16 %v107
    %v146 = vunpack.c.l.b16 %v108
    %v147 = vunpack.c.l.b16 %v109
    %v148 = vunpack.c.l.b16 %v110
    %v149 = vunpack.c.l.b16 %v111
    %v150 = vunpack.c.l.b16 %v112
    %v151 = vunpack.c.l.b16 %v113
    %v152 = vpack.c.b16 %v137, %v136
    %v153 = vpack.c.b16 %v139, %v138
    %v154 = vpack.c.b16 %v141, %v140
    %v155 = vpack.c.b16 %v143, %v142
    %v156 = vpack.c.b16 %v145, %v144
    %v157 = vpack.c.b16 %v147, %v146
    %v158 = vpack.c.b16 %v149, %v148
    %v159 = vpack.c.b16 %v151, %v150
    %168 = vmatprep.subr.bf16.mxu0 0
    %169 = vmatpush1.bf16.msra.mxu0 %v152
    %170 = vmatprep.subr.bf16.mxu0 0
    %171 = vmatpush1.bf16.msra.mxu0 %v153
    %172 = vmatprep.subr.bf16.mxu0 0
    %173 = vmatpush1.bf16.msra.mxu0 %v154
    %174 = vmatprep.subr.bf16.mxu0 0
    %175 = vmatpush1.bf16.msra.mxu0 %v155
    %176 = vmatprep.subr.bf16.mxu0 0
    %177 = vmatpush1.bf16.msra.mxu0 %v156
    %178 = vmatprep.subr.bf16.mxu0 0
    %179 = vmatpush1.bf16.msra.mxu0 %v157
    %180 = vmatprep.subr.bf16.mxu0 0
    %181 = vmatpush1.bf16.msra.mxu0 %v158
    %182 = vmatprep.subr.bf16.mxu0 0
    %183 = vmatpush1.bf16.msra.mxu0 %v159
    %184 = vmatprep.subr.bf16.mxu0 0
    %185 = vmatpush1.bf16.msra.mxu0 0
    %186 = vmatprep.subr.bf16.mxu0 0
    %187 = vmatpush1.bf16.msra.mxu0 0
    %188 = vmatprep.subr.bf16.mxu0 0
    %189 = vmatpush1.bf16.msra.mxu0 0
    %190 = vmatprep.subr.bf16.mxu0 0
    %191 = vmatpush1.bf16.msra.mxu0 0
    %192 = vmatprep.subr.bf16.mxu0 0
    %193 = vmatpush1.bf16.msra.mxu0 0
    %194 = vmatprep.subr.bf16.mxu0 0
    %195 = vmatpush1.bf16.msra.mxu0 0
    %196 = vmatprep.subr.bf16.mxu0 0
    %197 = vmatpush1.bf16.msra.mxu0 0
    %198 = vmatprep.subr.bf16.mxu0 0
    %199 = vmatpush1.bf16.msra.mxu0 0
    %200 = vmatprep.mubr.bf16.mxu0 0
    %201 = vmatmul.mubr.bf16.gmra.mrb[0].mxu0 %v118
    %v202 = vpop.f32.mrb[0].mxu0
    %v203 = vadd.f32 0.0, %v202
    %v204 = vpop.f32.mrb[0].mxu0
    %v205 = vpop.f32.mrb[0].mxu0
    %v206 = vadd.f32 0.0, %v205
    %v207 = vpop.f32.mrb[0].mxu0
    %208 = vdwg.mxu0
    %v209 = vld [vmem:[#allocation11] sm:$0xf]
    %v210 = vld [vmem:[#allocation11 + $0x4] sm:$0xf]
    %v211 = vld [vmem:[#allocation11 + $0x8] sm:$0xf]
    %v212 = vld [vmem:[#allocation11 + $0xc] sm:$0xf]
    %v213 = vld [vmem:[#allocation11 + $0x10] sm:$0xf]
    %v214 = vld [vmem:[#allocation11 + $0x14] sm:$0xf]
    %v215 = vld [vmem:[#allocation11 + $0x18] sm:$0xf]
    %v216 = vld [vmem:[#allocation11 + $0x1c] sm:$0xf]
    %v217 = vld [vmem:[#allocation11 + $0x20] sm:$0xf]
    %v218 = vld [vmem:[#allocation11 + $0x24] sm:$0xf]
    %v219 = vld [vmem:[#allocation11 + $0x28] sm:$0xf]
    %v220 = vld [vmem:[#allocation11 + $0x2c] sm:$0xf]
    %v221 = vld [vmem:[#allocation11 + $0x30] sm:$0xf]
    %v222 = vld [vmem:[#allocation11 + $0x34] sm:$0xf]
    %v223 = vld [vmem:[#allocation11 + $0x38] sm:$0xf]
    %v224 = vld [vmem:[#allocation11 + $0x3c] sm:$0xf]
    %v227 = vunpack.c.l.b16 %v96
    %v228 = vunpack.c.l.b16 %v97
    %v229 = vpack.c.b16 %v228, %v227
    %v247 = vunpack.c.l.b16 %v209
    %v248 = vunpack.c.l.b16 %v210
    %v249 = vunpack.c.l.b16 %v211
    %v250 = vunpack.c.l.b16 %v212
    %v251 = vunpack.c.l.b16 %v213
    %v252 = vunpack.c.l.b16 %v214
    %v253 = vunpack.c.l.b16 %v215
    %v254 = vunpack.c.l.b16 %v216
    %v255 = vunpack.c.l.b16 %v217
    %v256 = vunpack.c.l.b16 %v218
    %v257 = vunpack.c.l.b16 %v219
    %v258 = vunpack.c.l.b16 %v220
    %v259 = vunpack.c.l.b16 %v221
    %v260 = vunpack.c.l.b16 %v222
    %v261 = vunpack.c.l.b16 %v223
    %v262 = vunpack.c.l.b16 %v224
    %v263 = vpack.c.b16 %v248, %v247
    %v264 = vpack.c.b16 %v250, %v249
    %v265 = vpack.c.b16 %v252, %v251
    %v266 = vpack.c.b16 %v254, %v253
    %v267 = vpack.c.b16 %v256, %v255
    %v268 = vpack.c.b16 %v258, %v257
    %v269 = vpack.c.b16 %v260, %v259
    %v270 = vpack.c.b16 %v262, %v261
    %279 = vmatprep.subr.bf16.mxu0 0
    %280 = vmatpush1.bf16.msra.mxu0 %v263
    %281 = vmatprep.subr.bf16.mxu0 0
    %282 = vmatpush1.bf16.msra.mxu0 %v264
    %283 = vmatprep.subr.bf16.mxu0 0
    %284 = vmatpush1.bf16.msra.mxu0 %v265
    %285 = vmatprep.subr.bf16.mxu0 0
    %286 = vmatpush1.bf16.msra.mxu0 %v266
    %287 = vmatprep.subr.bf16.mxu0 0
    %288 = vmatpush1.bf16.msra.mxu0 %v267
    %289 = vmatprep.subr.bf16.mxu0 0
    %290 = vmatpush1.bf16.msra.mxu0 %v268
    %291 = vmatprep.subr.bf16.mxu0 0
    %292 = vmatpush1.bf16.msra.mxu0 %v269
    %293 = vmatprep.subr.bf16.mxu0 0
    %294 = vmatpush1.bf16.msra.mxu0 %v270
    %295 = vmatprep.subr.bf16.mxu0 0
    %296 = vmatpush1.bf16.msra.mxu0 0
    %297 = vmatprep.subr.bf16.mxu0 0
    %298 = vmatpush1.bf16.msra.mxu0 0
    %299 = vmatprep.subr.bf16.mxu0 0
    %300 = vmatpush1.bf16.msra.mxu0 0
    %301 = vmatprep.subr.bf16.mxu0 0
    %302 = vmatpush1.bf16.msra.mxu0 0
    %303 = vmatprep.subr.bf16.mxu0 0
    %304 = vmatpush1.bf16.msra.mxu0 0
    %305 = vmatprep.subr.bf16.mxu0 0
    %306 = vmatpush1.bf16.msra.mxu0 0
    %307 = vmatprep.subr.bf16.mxu0 0
    %308 = vmatpush1.bf16.msra.mxu0 0
    %309 = vmatprep.subr.bf16.mxu0 0
    %310 = vmatpush1.bf16.msra.mxu0 0
    %311 = vmatprep.mubr.bf16.mxu0 0
    %312 = vmatmul.mubr.bf16.gmra.mrb[0].mxu0 %v229
    %v313 = vpop.f32.mrb[0].mxu0
    %v314 = vadd.f32 0.0, %v313
    %v315 = vpop.f32.mrb[0].mxu0
    %v316 = vpop.f32.mrb[0].mxu0
    %v317 = vadd.f32 0.0, %v316
    %v318 = vpop.f32.mrb[0].mxu0
    %319 = vdwg.mxu0
    %v320 = vld [vmem:[#allocation13] sm:$0xf]
    %v321 = vld [vmem:[#allocation13 + $0x4] sm:$0xf]
    %v322 = vld [vmem:[#allocation13 + $0x8] sm:$0xf]
    %v323 = vld [vmem:[#allocation13 + $0xc] sm:$0xf]
    %v324 = vld [vmem:[#allocation13 + $0x10] sm:$0xf]
    %v325 = vld [vmem:[#allocation13 + $0x14] sm:$0xf]
    %v326 = vld [vmem:[#allocation13 + $0x18] sm:$0xf]
    %v327 = vld [vmem:[#allocation13 + $0x1c] sm:$0xf]
    %v328 = vld [vmem:[#allocation13 + $0x20] sm:$0xf]
    %v329 = vld [vmem:[#allocation13 + $0x24] sm:$0xf]
    %v330 = vld [vmem:[#allocation13 + $0x28] sm:$0xf]
    %v331 = vld [vmem:[#allocation13 + $0x2c] sm:$0xf]
    %v332 = vld [vmem:[#allocation13 + $0x30] sm:$0xf]
    %v333 = vld [vmem:[#allocation13 + $0x34] sm:$0xf]
    %v334 = vld [vmem:[#allocation13 + $0x38] sm:$0xf]
    %v335 = vld [vmem:[#allocation13 + $0x3c] sm:$0xf]
    %v352 = vunpack.c.l.b16 %v320
    %v353 = vunpack.c.l.b16 %v321
    %v354 = vunpack.c.l.b16 %v322
    %v355 = vunpack.c.l.b16 %v323
    %v356 = vunpack.c.l.b16 %v324
    %v357 = vunpack.c.l.b16 %v325
    %v358 = vunpack.c.l.b16 %v326
    %v359 = vunpack.c.l.b16 %v327
    %v360 = vunpack.c.l.b16 %v328
    %v361 = vunpack.c.l.b16 %v329
    %v362 = vunpack.c.l.b16 %v330
    %v363 = vunpack.c.l.b16 %v331
    %v364 = vunpack.c.l.b16 %v332
    %v365 = vunpack.c.l.b16 %v333
    %v366 = vunpack.c.l.b16 %v334
    %v367 = vunpack.c.l.b16 %v335
    %v368 = vpack.c.b16 %v353, %v352
    %v369 = vpack.c.b16 %v355, %v354
    %v370 = vpack.c.b16 %v357, %v356
    %v371 = vpack.c.b16 %v359, %v358
    %v372 = vpack.c.b16 %v361, %v360
    %v373 = vpack.c.b16 %v363, %v362
    %v374 = vpack.c.b16 %v365, %v364
    %v375 = vpack.c.b16 %v367, %v366
    %384 = vmatprep.subr.bf16.mxu0 0
    %385 = vmatpush1.bf16.msra.mxu0 %v368
    %386 = vmatprep.subr.bf16.mxu0 0
    %387 = vmatpush1.bf16.msra.mxu0 %v369
    %388 = vmatprep.subr.bf16.mxu0 0
    %389 = vmatpush1.bf16.msra.mxu0 %v370
    %390 = vmatprep.subr.bf16.mxu0 0
    %391 = vmatpush1.bf16.msra.mxu0 %v371
    %392 = vmatprep.subr.bf16.mxu0 0
    %393 = vmatpush1.bf16.msra.mxu0 %v372
    %394 = vmatprep.subr.bf16.mxu0 0
    %395 = vmatpush1.bf16.msra.mxu0 %v373
    %396 = vmatprep.subr.bf16.mxu0 0
    %397 = vmatpush1.bf16.msra.mxu0 %v374
    %398 = vmatprep.subr.bf16.mxu0 0
    %399 = vmatpush1.bf16.msra.mxu0 %v375
    %400 = vmatprep.subr.bf16.mxu0 0
    %401 = vmatpush1.bf16.msra.mxu0 0
    %402 = vmatprep.subr.bf16.mxu0 0
    %403 = vmatpush1.bf16.msra.mxu0 0
    %404 = vmatprep.subr.bf16.mxu0 0
    %405 = vmatpush1.bf16.msra.mxu0 0
    %406 = vmatprep.subr.bf16.mxu0 0
    %407 = vmatpush1.bf16.msra.mxu0 0
    %408 = vmatprep.subr.bf16.mxu0 0
    %409 = vmatpush1.bf16.msra.mxu0 0
    %410 = vmatprep.subr.bf16.mxu0 0
    %411 = vmatpush1.bf16.msra.mxu0 0
    %412 = vmatprep.subr.bf16.mxu0 0
    %413 = vmatpush1.bf16.msra.mxu0 0
    %414 = vmatprep.subr.bf16.mxu0 0
    %415 = vmatpush1.bf16.msra.mxu0 0
    %416 = vmatprep.mubr.bf16.mxu0 0
    %417 = vmatmul.mubr.bf16.gmra.mrb[0].mxu0 %v229
    %v418 = vpop.f32.mrb[0].mxu0
    %v419 = vadd.f32 0.0, %v418
    %v420 = vpop.f32.mrb[0].mxu0
    %v421 = vpop.f32.mrb[0].mxu0
    %v422 = vadd.f32 0.0, %v421
    %v423 = vpop.f32.mrb[0].mxu0
    %424 = vdwg.mxu0
    %p425 = scmp.eq.s32.totalorder 0, 0
    // Predicated region
    $region42: #{tpu_custom_call.1} parent=1 // pred_check
      %p426 = pneg %p425
    $region43: #{tpu_custom_call.1} parent=1 // pred_check_branch
      %428 = sbr.rel (%p426) target = $region45
    $region44: #{tpu_custom_call.1} parent=1 // pred_region
      %429 = vst [vmem:[#allocation2] sm:$0xff] %v203
      %430 = vst [vmem:[#allocation2 + $0x8] sm:$0xff] %v206
      %431 = vst [vmem:[#allocation3] sm:$0xff] %v314
      %432 = vst [vmem:[#allocation3 + $0x8] sm:$0xff] %v317
      %433 = vst [vmem:[#allocation4] sm:$0xff] %v419
      %434 = vst [vmem:[#allocation4 + $0x8] sm:$0xff] %v422
    $region45: #{tpu_custom_call.1} parent=1 // pred_fallthru
      _
    %p435 = scmp.gt.s32.totalorder 0, 0
    // Predicated region
    $region46: #{tpu_custom_call.1} parent=1 // pred_check
      %p436 = pneg %p435
    $region47: #{tpu_custom_call.1} parent=1 // pred_check_branch
      %438 = sbr.rel (%p436) target = $region49
    $region48: #{tpu_custom_call.1} parent=1 // pred_region
      %v439 = vld [vmem:[#allocation2] sm:$0xff]
      %v440 = vld [vmem:[#allocation2 + $0x8] sm:$0xff]
      %v441 = vadd.f32 %v439, %v203
      %v442 = vadd.f32 %v440, %v206
      %443 = vst [vmem:[#allocation2] sm:$0xff] %v441
      %444 = vst [vmem:[#allocation2 + $0x8] sm:$0xff] %v442
      %v445 = vld [vmem:[#allocation3] sm:$0xff]
      %v446 = vld [vmem:[#allocation3 + $0x8] sm:$0xff]
      %v447 = vadd.f32 %v445, %v314
      %v448 = vadd.f32 %v446, %v317
      %449 = vst [vmem:[#allocation3] sm:$0xff] %v447
      %450 = vst [vmem:[#allocation3 + $0x8] sm:$0xff] %v448
      %v451 = vld [vmem:[#allocation4] sm:$0xff]
      %v452 = vld [vmem:[#allocation4 + $0x8] sm:$0xff]
      %v453 = vadd.f32 %v451, %v419
      %v454 = vadd.f32 %v452, %v422
      %455 = vst [vmem:[#allocation4] sm:$0xff] %v453
      %456 = vst [vmem:[#allocation4 + $0x8] sm:$0xff] %v454
    $region49: #{tpu_custom_call.1} parent=1 // pred_fallthru
      _
    // Predicated region
    $region50: #{tpu_custom_call.1} parent=1 // pred_check
      %p457 = pneg %p425
    $region51: #{tpu_custom_call.1} parent=1 // pred_check_branch
      %459 = sbr.rel (%p457) target = $region53
    $region52: #{tpu_custom_call.1} parent=1 // pred_region
      %v460 = vld [vmem:[#allocation2] sm:$0xff]
      %v461 = vld [vmem:[#allocation2 + $0x8] sm:$0xff]
      %v462 = vpack.c.bf16 %v461, %v460
      %v464 = vunpack.c.l.b16 %v462
      %v465 = vunpack.c.h.b16 %v462
      %v466 = vpack.c.b16 %v464, %v464
      %v467 = vpack.c.b16 %v465, %v465
      %470 = vst [vmem:[#allocation14] sm:$0xf] %v466
      %471 = vst [vmem:[#allocation14 + $0x4] sm:$0xf] %v467
      %v472 = vld [vmem:[#allocation3] sm:$0xff]
      %v473 = vld [vmem:[#allocation3 + $0x8] sm:$0xff]
      %v474 = vpack.c.bf16 %v473, %v472
      %v476 = vunpack.c.l.b16 %v474
      %v477 = vunpack.c.h.b16 %v474
      %v478 = vpack.c.b16 %v476, %v476
      %v479 = vpack.c.b16 %v477, %v477
      %482 = vst [vmem:[#allocation15] sm:$0xf] %v478
      %483 = vst [vmem:[#allocation15 + $0x4] sm:$0xf] %v479
      %v484 = vld [vmem:[#allocation4] sm:$0xff]
      %v485 = vld [vmem:[#allocation4 + $0x8] sm:$0xff]
      %v486 = vpack.c.bf16 %v485, %v484
      %v488 = vunpack.c.l.b16 %v486
      %v489 = vunpack.c.h.b16 %v486
      %v490 = vpack.c.b16 %v488, %v488
      %v491 = vpack.c.b16 %v489, %v489
      %494 = vst [vmem:[#allocation17] sm:$0xf] %v490
      %495 = vst [vmem:[#allocation17 + $0x4] sm:$0xf] %v491
    $region53: #{tpu_custom_call.1} parent=1 // pred_fallthru
      _
    // Predicated region
    $region54: #{tpu_custom_call.1} parent=1 // pred_check
      _
    $region55: #{tpu_custom_call.1} parent=1 // pred_check_branch
      %497 = sbr.rel (0) target = $region57
    $region56: #{tpu_custom_call.1} parent=1 // pred_region
      %s499 = ssub.s32 128, 128
      %500 = vsyncadd [#allocation7], %s499
      %s501 = sshll.u32 [#allocation14], 4
      %s502 = int_to_ptr.vmem [resolvable:$true] %s501
      %507 = dma.vmem_to_hbm [thread:$0]  %s502, 128, %s5, [#allocation7], 64, 64, 4
    $region57: #{tpu_custom_call.1} parent=1 // pred_fallthru
      _
    // Predicated region
    $region58: #{tpu_custom_call.1} parent=1 // pred_check
      _
    $region59: #{tpu_custom_call.1} parent=1 // pred_check_branch
      %509 = sbr.rel (0) target = $region61
    $region60: #{tpu_custom_call.1} parent=1 // pred_region
      %s511 = ssub.s32 128, 128
      %512 = vsyncadd [#allocation16], %s511
      %s513 = sshll.u32 [#allocation15], 4
      %s514 = int_to_ptr.vmem [resolvable:$true] %s513
      %519 = dma.vmem_to_hbm [thread:$0]  %s514, 128, %s6, [#allocation16], 64, 64, 4
    $region61: #{tpu_custom_call.1} parent=1 // pred_fallthru
      _
    // Predicated region
    $region62: #{tpu_custom_call.1} parent=1 // pred_check
      _
    $region63: #{tpu_custom_call.1} parent=1 // pred_check_branch
      %521 = sbr.rel (0) target = $region65
    $region64: #{tpu_custom_call.1} parent=1 // pred_region
      %s523 = ssub.s32 128, 128
      %524 = vsyncadd [#allocation16], %s523
      %s525 = sshll.u32 [#allocation17], 4
      %s526 = int_to_ptr.vmem [resolvable:$true] %s525
      %531 = dma.vmem_to_hbm [thread:$0]  %s526, 128, %s7, [#allocation16], 64, 64, 4
    $region65: #{tpu_custom_call.1} parent=1 // pred_fallthru
      _
    // Predicated region
    $region66: #{tpu_custom_call.1} parent=1 // pred_check
      _
    $region67: #{tpu_custom_call.1} parent=1 // pred_check_branch
      %533 = sbr.rel (0) target = $region69
    $region68: #{tpu_custom_call.1} parent=1 // pred_region
      %534 = dma.done [#allocation7], 128
    $region69: #{tpu_custom_call.1} parent=1 // pred_fallthru
      _
    // Predicated region
    $region70: #{tpu_custom_call.1} parent=1 // pred_check
      _
    $region71: #{tpu_custom_call.1} parent=1 // pred_check_branch
      %536 = sbr.rel (0) target = $region73
    $region72: #{tpu_custom_call.1} parent=1 // pred_region
      %537 = dma.done [#allocation16], 128
    $region73: #{tpu_custom_call.1} parent=1 // pred_fallthru
      _
    // Predicated region
    $region74: #{tpu_custom_call.1} parent=1 // pred_check
      _
    $region75: #{tpu_custom_call.1} parent=1 // pred_check_branch
      %539 = sbr.rel (0) target = $region77
    $region76: #{tpu_custom_call.1} parent=1 // pred_region
      %540 = dma.done [#allocation16], 128
    $region77: #{tpu_custom_call.1} parent=1 // pred_fallthru
      _
    %541 = vsyncpa [#allocation6], 1
    %542 = vsyncpa [#allocation9], 1
    %543 = vsyncpa [#allocation12], 1
    %544 = vsyncpa [#allocation7], 1
    %545 = vsyncpa [#allocation16], 1

</llo_original>
